<compile_context>
chip_gen: v5e
topology: v5e:2x2
jax: 0.10.0
libtpu: 0.0.40
codegen_flags: <defaults>
</compile_context>

<pallas_src>
import functools
import math

import jax
import jax.numpy as jnp
from jax import lax
from jax.experimental import pallas as pl
from jax.experimental.pallas import tpu as pltpu


# --------------------------- Pallas kernel ----------------------------------

def _rssm_rollout_kernel(a_ref, s0_ref, h0_ref, eps_ref,
                         w_is_ref, w_ia_ref, w_h_ref, w_st_ref, b_ref,
                         h_seq_ref, musig_ref,
                         h_scr, s_scr, *, h_size, s_size, min_sigma):
    """One fused RSSM step per grid index t; h/s carried in VMEM scratch.

    a_ref:    (1, N, A)   action for step t          (per-step block)
    s0_ref:   (N, S)      initial state              (resident)
    h0_ref:   (N, H)      initial belief             (resident)
    eps_ref:  (1, N, S)   reparameterization noise   (per-step block)
    w_is_ref: (S, 3H)     input(s)->gates  [r|z|n]   (resident)
    w_ia_ref: (A, 3H)     input(a)->gates  [r|z|n]   (resident)
    w_h_ref:  (H, 3H)     hidden->gates    [r|z|n]   (resident)
    w_st_ref: (H, 2S)     state head                 (resident)
    b_ref:    (3, max(3H,2S))  rows = [b_ih | b_hh | b_state(padded)]
    h_seq_ref:  (1, N, H)   output block for step t
    musig_ref:  (1, N, 2S)  output block: [mu | softplus(raw)+min_sigma]
    h_scr/s_scr: VMEM carries across grid steps.
    """
    t = pl.program_id(0)
    H, S = h_size, s_size

    @pl.when(t == 0)
    def _():
        h_scr[...] = h0_ref[...]
        s_scr[...] = s0_ref[...]

    h = h_scr[...]
    s = s_scr[...]
    a = a_ref[0]

    b_i = b_ref[0:1, :3 * H]
    b_h = b_ref[1:2, :3 * H]
    b_st = b_ref[2:3, :2 * S]

    def dot(u, w_ref):
        return jnp.dot(u, w_ref[...], preferred_element_type=jnp.float32)

    # Fused gate pre-activations: columns are [r | z | n].
    gi = dot(s, w_is_ref) + dot(a, w_ia_ref) + b_i      # (N, 3H)
    gh = dot(h, w_h_ref) + b_h                          # (N, 3H)

    def sigmoid(v):
        # exact & overflow-free; tanh runs on the EUP slot (no VALU divide)
        return 0.5 * (jnp.tanh(0.5 * v) + 1.0)

    r = sigmoid(gi[:, 0 * H:1 * H] + gh[:, 0 * H:1 * H])
    z = sigmoid(gi[:, 1 * H:2 * H] + gh[:, 1 * H:2 * H])
    n = jnp.tanh(gi[:, 2 * H:3 * H] + r * gh[:, 2 * H:3 * H])
    h_new = (1.0 - z) * n + z * h

    # State head: one lane-contiguous (N, 2S) result; sigma half selected via
    # lane-iota mask (no mid-vreg slice before the store).
    musig = dot(h_new, w_st_ref) + b_st
    softplus = jnp.maximum(musig, 0.0) + jnp.log(1.0 + jnp.exp(-jnp.abs(musig)))
    lane = lax.broadcasted_iota(jnp.int32, musig.shape, dimension=1)
    musig_out = jnp.where(lane >= S, softplus + min_sigma, musig)

    h_seq_ref[0] = h_new.astype(h_seq_ref.dtype)
    musig_ref[0] = musig_out.astype(musig_ref.dtype)

    # Carry for step t+1: h, and reparameterized state sample mu + sigma*eps.
    h_scr[...] = h_new
    mu = musig_out[:, :S]
    sigma = musig_out[:, S:]
    s_scr[...] = mu + sigma * eps_ref[0]


# --------------------------- params ------------------------------------------

def init_params(key, h_size, s_size, a_size):
    """PyTorch-style init (GRUCell + Linear), stored fused for the kernel."""
    in_size = s_size + a_size
    ks = jax.random.split(key, 6)
    stdv = 1.0 / math.sqrt(h_size)

    def u(k, shape):
        return jax.random.uniform(k, shape, jnp.float32, -stdv, stdv)

    # torch layouts: weight_ih (3H, in), weight_hh (3H, H), rows = [r; z; n]
    w_ih = u(ks[0], (3 * h_size, in_size))
    w_hh = u(ks[1], (3 * h_size, h_size))
    b_ih = u(ks[2], (3 * h_size,))
    b_hh = u(ks[3], (3 * h_size,))
    w_st = u(ks[4], (2 * s_size, h_size))     # Linear(h_size, 2*s_size)
    b_st = u(ks[5], (2 * s_size,))

    w_i = jnp.transpose(w_ih)                 # (in, 3H), cols [r | z | n]
    width = max(3 * h_size, 2 * s_size)
    b_pack = jnp.zeros((3, width), jnp.float32)
    b_pack = b_pack.at[0, :3 * h_size].set(b_ih)
    b_pack = b_pack.at[1, :3 * h_size].set(b_hh)
    b_pack = b_pack.at[2, :2 * s_size].set(b_st)

    return dict(
        w_is=w_i[:s_size, :],                 # (S, 3H)
        w_ia=w_i[s_size:, :],                 # (A, 3H)
        w_h=jnp.transpose(w_hh),              # (H, 3H)
        w_st=jnp.transpose(w_st),             # (H, 2S)
        b_pack=b_pack,                        # (3, max(3H, 2S))
    )


# --------------------------- wrappers ----------------------------------------

def _pad_rows(x, n_pad):
    pad = n_pad - x.shape[-2]
    if pad == 0:
        return x
    widths = [(0, 0)] * x.ndim
    widths[-2] = (0, pad)
    return jnp.pad(x, widths)


def rssm_rollout(params, h0, s0, a_seq, eps, *, min_sigma=1e-4):
    """Fused T-step rollout: one pallas_call, weights resident, h/s in VMEM.

    a_seq, eps: (T, N, a_size) / (T, N, s_size).
    Returns (h_seq, mu_seq, sigma_seq) each with leading dim T.
    """
    T, N, a_size = a_seq.shape
    h_size = h0.shape[-1]
    s_size = s0.shape[-1]
    n_pad = max(8, ((N + 7) // 8) * 8)        # f32 sublane multiple
    bw = params["b_pack"].shape[-1]

    h0p = _pad_rows(h0.astype(jnp.float32), n_pad)
    s0p = _pad_rows(s0.astype(jnp.float32), n_pad)
    a_p = _pad_rows(a_seq.astype(jnp.float32), n_pad)
    eps_p = _pad_rows(eps.astype(jnp.float32), n_pad)

    kernel = functools.partial(_rssm_rollout_kernel, h_size=h_size,
                               s_size=s_size, min_sigma=min_sigma)

    grid_spec = pltpu.PrefetchScalarGridSpec(
        num_scalar_prefetch=0,
        grid=(T,),
        in_specs=[
            pl.BlockSpec((1, n_pad, a_size), lambda t: (t, 0, 0)),      # a_t
            pl.BlockSpec((n_pad, s_size), lambda t: (0, 0)),            # s0
            pl.BlockSpec((n_pad, h_size), lambda t: (0, 0)),            # h0
            pl.BlockSpec((1, n_pad, s_size), lambda t: (t, 0, 0)),      # eps_t
            pl.BlockSpec((s_size, 3 * h_size), lambda t: (0, 0)),       # w_is
            pl.BlockSpec((a_size, 3 * h_size), lambda t: (0, 0)),       # w_ia
            pl.BlockSpec((h_size, 3 * h_size), lambda t: (0, 0)),       # w_h
            pl.BlockSpec((h_size, 2 * s_size), lambda t: (0, 0)),       # w_st
            pl.BlockSpec((3, bw), lambda t: (0, 0)),                    # biases
        ],
        out_specs=(
            pl.BlockSpec((1, n_pad, h_size), lambda t: (t, 0, 0)),
            pl.BlockSpec((1, n_pad, 2 * s_size), lambda t: (t, 0, 0)),
        ),
        scratch_shapes=[
            pltpu.VMEM((n_pad, h_size), jnp.float32),   # carried belief h
            pltpu.VMEM((n_pad, s_size), jnp.float32),   # carried state s
        ],
    )

    h_seq, musig_seq = pl.pallas_call(
        kernel,
        grid_spec=grid_spec,
        out_shape=(jax.ShapeDtypeStruct((T, n_pad, h_size), jnp.float32),
                   jax.ShapeDtypeStruct((T, n_pad, 2 * s_size), jnp.float32)),
        compiler_params=pltpu.CompilerParams(
            dimension_semantics=("arbitrary",)),   # recurrent carry -> serial
    )(a_p, s0p, h0p, eps_p,
      params["w_is"], params["w_ia"], params["w_h"], params["w_st"],
      params["b_pack"])

    h_seq = h_seq[:, :N, :]
    mu_seq = musig_seq[:, :N, :s_size]
    sigma_seq = musig_seq[:, :N, s_size:]
    return h_seq, mu_seq, sigma_seq


def rssm_forward(params, h, s, a, *, min_sigma=1e-4):
    """Single-step forward matching RSSM.forward(h, s, a): (h_new, mu, sigma)."""
    eps = jnp.zeros_like(s)   # unused for T=1
    h_seq, mu_seq, sigma_seq = rssm_rollout(
        params, h, s, a[None], eps[None], min_sigma=min_sigma)
    return h_seq[0], mu_seq[0], sigma_seq[0]


# --------------------------- pure-JAX reference -------------------------------

def rssm_step_reference(params, h, s, a, min_sigma):
    H = h.shape[-1]
    S = s.shape[-1]
    b_i = params["b_pack"][0, :3 * H]
    b_h = params["b_pack"][1, :3 * H]
    b_st = params["b_pack"][2, :2 * S]
    gi = s @ params["w_is"] + a @ params["w_ia"] + b_i
    gh = h @ params["w_h"] + b_h
    r = jax.nn.sigmoid(gi[:, :H] + gh[:, :H])
    z = jax.nn.sigmoid(gi[:, H:2 * H] + gh[:, H:2 * H])
    n = jnp.tanh(gi[:, 2 * H:] + r * gh[:, 2 * H:])
    h_new = (1.0 - z) * n + z * h
    musig = h_new @ params["w_st"] + b_st
    mu = musig[:, :S]
    sigma = jax.nn.softplus(musig[:, S:]) + min_sigma
    return h_new, mu, sigma


def rssm_rollout_reference(params, h0, s0, a_seq, eps, min_sigma):
    def step(carry, inp):
        h, s = carry
        a, e = inp
        h_new, mu, sigma = rssm_step_reference(params, h, s, a, min_sigma)
        return (h_new, mu + sigma * e), (h_new, mu, sigma)
    _, (h_seq, mu_seq, sig_seq) = lax.scan(step, (h0, s0), (a_seq, eps))
    return h_seq, mu_seq, sig_seq


# --------------------------- demo / checks ------------------------------------

if __name__ == "__main__":
    key = jax.random.PRNGKey(0)
    h_size, s_size, a_size, batch, T = 32, 16, 8, 2, 8
    min_sigma = 1e-4

    kp, kh, ks, ka, ke = jax.random.split(key, 5)
    params = init_params(kp, h_size, s_size, a_size)
    h0 = jax.random.normal(kh, (batch, h_size), jnp.float32)
    s0 = jax.random.normal(ks, (batch, s_size), jnp.float32)
    a_seq = jax.random.normal(ka, (T, batch, a_size), jnp.float32)
    eps = jax.random.normal(ke, (T, batch, s_size), jnp.float32)

    # ---- single-step forward (the original module's forward(h, s, a)) ----
    fwd = jax.jit(functools.partial(rssm_forward, params, min_sigma=min_sigma))
    h_new, mu, sigma = fwd(h0, s0, a_seq[0])
    jax.block_until_ready((h_new, mu, sigma))

    assert h_new.shape == (batch, h_size), h_new.shape
    assert mu.shape == (batch, s_size), mu.shape
    assert sigma.shape == (batch, s_size), sigma.shape
    assert bool(jnp.all(sigma > 0.0)), "softplus + min_sigma must be positive"
    assert bool(jnp.all(jnp.isfinite(h_new)))
    assert bool(jnp.all(jnp.isfinite(mu))) and bool(jnp.all(jnp.isfinite(sigma)))

    rh, rmu, rsig = rssm_step_reference(params, h0, s0, a_seq[0], min_sigma)
    assert bool(jnp.allclose(h_new, rh, atol=1e-4, rtol=1e-4))
    assert bool(jnp.allclose(mu, rmu, atol=1e-4, rtol=1e-4))
    assert bool(jnp.allclose(sigma, rsig, atol=1e-4, rtol=1e-4))

    # ---- fused T-step rollout: one kernel launch, weights DMA'd once ----
    roll = jax.jit(functools.partial(rssm_rollout, params, min_sigma=min_sigma))
    h_seq, mu_seq, sig_seq = roll(h0, s0, a_seq, eps)
    jax.block_until_ready((h_seq, mu_seq, sig_seq))

    assert h_seq.shape == (T, batch, h_size)
    assert mu_seq.shape == (T, batch, s_size)
    assert sig_seq.shape == (T, batch, s_size)

    rhs, rmus, rsgs = rssm_rollout_reference(params, h0, s0, a_seq, eps, min_sigma)
    assert bool(jnp.allclose(h_seq, rhs, atol=1e-4, rtol=1e-4))
    assert bool(jnp.allclose(mu_seq, rmus, atol=1e-4, rtol=1e-4))
    assert bool(jnp.allclose(sig_seq, rsgs, atol=1e-4, rtol=1e-4))

    print("KERNEL_OK")
</pallas_src>

<mosaic_0001>
module attributes {stable_mosaic.version = 11 : i64} {
  func.func @_rssm_rollout_kernel(%arg0: i32, %arg1: memref<1x8x8xf32, #tpu.memory_space<vmem>>, %arg2: memref<8x16xf32, #tpu.memory_space<vmem>>, %arg3: memref<8x32xf32, #tpu.memory_space<vmem>>, %arg4: memref<1x8x16xf32, #tpu.memory_space<vmem>>, %arg5: memref<16x96xf32, #tpu.memory_space<vmem>>, %arg6: memref<8x96xf32, #tpu.memory_space<vmem>>, %arg7: memref<32x96xf32, #tpu.memory_space<vmem>>, %arg8: memref<32x32xf32, #tpu.memory_space<vmem>>, %arg9: memref<3x96xf32, #tpu.memory_space<vmem>>, %arg10: memref<1x8x32xf32, #tpu.memory_space<vmem>>, %arg11: memref<1x8x32xf32, #tpu.memory_space<vmem>>, %arg12: memref<8x32xf32, #tpu.memory_space<vmem>>, %arg13: memref<8x16xf32, #tpu.memory_space<vmem>>) attributes {dimension_semantics = [#tpu.dimension_semantics<arbitrary>], iteration_bounds = array<i64: 1>, scalar_prefetch = 0 : i64, scratch_operands = 2 : i64, tpu.core_type = #tpu.core_type<tc>, window_params = [{transform_indices = @transform_0, window_bounds = array<i64: 1, 8, 8>}, {pipeline_mode = #tpu.pipeline_mode<synchronous>, transform_indices = @transform_1, window_bounds = array<i64: 8, 16>}, {pipeline_mode = #tpu.pipeline_mode<synchronous>, transform_indices = @transform_2, window_bounds = array<i64: 8, 32>}, {transform_indices = @transform_3, window_bounds = array<i64: 1, 8, 16>}, {pipeline_mode = #tpu.pipeline_mode<synchronous>, transform_indices = @transform_4, window_bounds = array<i64: 16, 96>}, {pipeline_mode = #tpu.pipeline_mode<synchronous>, transform_indices = @transform_5, window_bounds = array<i64: 8, 96>}, {pipeline_mode = #tpu.pipeline_mode<synchronous>, transform_indices = @transform_6, window_bounds = array<i64: 32, 96>}, {pipeline_mode = #tpu.pipeline_mode<synchronous>, transform_indices = @transform_7, window_bounds = array<i64: 32, 32>}, {pipeline_mode = #tpu.pipeline_mode<synchronous>, transform_indices = @transform_8, window_bounds = array<i64: 3, 96>}, {transform_indices = @transform_9, window_bounds = array<i64: 1, 8, 32>}, {transform_indices = @transform_10, window_bounds = array<i64: 1, 8, 32>}]} {
    %c0_i32 = arith.constant 0 : i32
    %0 = arith.cmpi eq, %arg0, %c0_i32 : i32
    %1 = arith.extui %0 : i1 to i32
    %c0_i32_0 = arith.constant 0 : i32
    %2 = arith.cmpi ne, %1, %c0_i32_0 : i32
    scf.if %2 {
      %c0_46 = arith.constant 0 : index
      %c0_47 = arith.constant 0 : index
      %85 = vector.load %arg3[%c0_46, %c0_47] : memref<8x32xf32, #tpu.memory_space<vmem>>, vector<8x32xf32>
      %c0_48 = arith.constant 0 : index
      %c0_49 = arith.constant 0 : index
      %86 = vector.load %arg12[%c0_48, %c0_49] : memref<8x32xf32, #tpu.memory_space<vmem>>, vector<8x32xf32>
      tpu.vector_store %arg12[%c0_48, %c0_49], %85 {strides = array<i32>} : memref<8x32xf32, #tpu.memory_space<vmem>>, vector<8x32xf32>,
      %c0_50 = arith.constant 0 : index
      %c0_51 = arith.constant 0 : index
      %87 = vector.load %arg2[%c0_50, %c0_51] : memref<8x16xf32, #tpu.memory_space<vmem>>, vector<8x16xf32>
      %c0_52 = arith.constant 0 : index
      %c0_53 = arith.constant 0 : index
      %88 = vector.load %arg13[%c0_52, %c0_53] : memref<8x16xf32, #tpu.memory_space<vmem>>, vector<8x16xf32>
      tpu.vector_store %arg13[%c0_52, %c0_53], %87 {strides = array<i32>} : memref<8x16xf32, #tpu.memory_space<vmem>>, vector<8x16xf32>,
    } else {
    }
    %c0 = arith.constant 0 : index
    %c0_1 = arith.constant 0 : index
    %3 = vector.load %arg12[%c0, %c0_1] : memref<8x32xf32, #tpu.memory_space<vmem>>, vector<8x32xf32>
    %c0_2 = arith.constant 0 : index
    %c0_3 = arith.constant 0 : index
    %4 = vector.load %arg13[%c0_2, %c0_3] : memref<8x16xf32, #tpu.memory_space<vmem>>, vector<8x16xf32>
    %c0_4 = arith.constant 0 : index
    %c0_5 = arith.constant 0 : index
    %c0_6 = arith.constant 0 : index
    %5 = vector.load %arg1[%c0_4, %c0_5, %c0_6] : memref<1x8x8xf32, #tpu.memory_space<vmem>>, vector<1x8x8xf32>
    %6 = vector.shape_cast %5 : vector<1x8x8xf32> to vector<8x8xf32>
    %c0_7 = arith.constant 0 : index
    %c0_8 = arith.constant 0 : index
    %7 = vector.load %arg9[%c0_7, %c0_8] : memref<3x96xf32, #tpu.memory_space<vmem>>, vector<1x96xf32>
    %c1 = arith.constant 1 : index
    %c0_9 = arith.constant 0 : index
    %8 = vector.load %arg9[%c1, %c0_9] : memref<3x96xf32, #tpu.memory_space<vmem>>, vector<1x96xf32>
    %c2 = arith.constant 2 : index
    %c0_10 = arith.constant 0 : index
    %9 = vector.load %arg9[%c2, %c0_10] : memref<3x96xf32, #tpu.memory_space<vmem>>, vector<1x32xf32>
    %c0_11 = arith.constant 0 : index
    %c0_12 = arith.constant 0 : index
    %10 = vector.load %arg5[%c0_11, %c0_12] : memref<16x96xf32, #tpu.memory_space<vmem>>, vector<16x96xf32>
    %cst = arith.constant dense<0.000000e+00> : vector<8x96xf32>
    %11 = tpu.matmul %4, %10, %cst {dimension_numbers = #tpu.dot_dimension_numbers<[1], [0], [0], [1], [0, 0, 1, 1], [], []>} : vector<8x16xf32>, vector<16x96xf32>, vector<8x96xf32> -> vector<8x96xf32>
    %c0_13 = arith.constant 0 : index
    %c0_14 = arith.constant 0 : index
    %12 = vector.load %arg6[%c0_13, %c0_14] : memref<8x96xf32, #tpu.memory_space<vmem>>, vector<8x96xf32>
    %cst_15 = arith.constant dense<0.000000e+00> : vector<8x96xf32>
    %13 = tpu.matmul %6, %12, %cst_15 {dimension_numbers = #tpu.dot_dimension_numbers<[1], [0], [0], [1], [0, 0, 1, 1], [], []>} : vector<8x8xf32>, vector<8x96xf32>, vector<8x96xf32> -> vector<8x96xf32>
    %14 = arith.addf %11, %13 : vector<8x96xf32>
    %15 = vector.broadcast %7 : vector<1x96xf32> to vector<8x96xf32>
    %16 = arith.addf %14, %15 : vector<8x96xf32>
    %c0_16 = arith.constant 0 : index
    %c0_17 = arith.constant 0 : index
    %17 = vector.load %arg7[%c0_16, %c0_17] : memref<32x96xf32, #tpu.memory_space<vmem>>, vector<32x96xf32>
    %cst_18 = arith.constant dense<0.000000e+00> : vector<8x96xf32>
    %18 = tpu.matmul %3, %17, %cst_18 {dimension_numbers = #tpu.dot_dimension_numbers<[1], [0], [0], [1], [0, 0, 1, 1], [], []>} : vector<8x32xf32>, vector<32x96xf32>, vector<8x96xf32> -> vector<8x96xf32>
    %19 = vector.broadcast %8 : vector<1x96xf32> to vector<8x96xf32>
    %20 = arith.addf %18, %19 : vector<8x96xf32>
    %21 = vector.extract_strided_slice %16 {offsets = [0, 0], sizes = [8, 32], strides = [1, 1]} : vector<8x96xf32> to vector<8x32xf32>
    %22 = vector.extract_strided_slice %20 {offsets = [0, 0], sizes = [8, 32], strides = [1, 1]} : vector<8x96xf32> to vector<8x32xf32>
    %23 = arith.addf %21, %22 : vector<8x32xf32>
    %cst_19 = arith.constant 5.000000e-01 : f32
    %24 = vector.broadcast %cst_19 : f32 to vector<8x32xf32>
    %25 = arith.mulf %24, %23 : vector<8x32xf32>
    %26 = math.tanh %25 : vector<8x32xf32>
    %cst_20 = arith.constant 1.000000e+00 : f32
    %27 = vector.broadcast %cst_20 : f32 to vector<8x32xf32>
    %28 = arith.addf %26, %27 : vector<8x32xf32>
    %cst_21 = arith.constant 5.000000e-01 : f32
    %29 = vector.broadcast %cst_21 : f32 to vector<8x32xf32>
    %30 = arith.mulf %29, %28 : vector<8x32xf32>
    %31 = vector.extract_strided_slice %16 {offsets = [0, 32], sizes = [8, 32], strides = [1, 1]} : vector<8x96xf32> to vector<8x32xf32>
    %32 = vector.extract_strided_slice %20 {offsets = [0, 32], sizes = [8, 32], strides = [1, 1]} : vector<8x96xf32> to vector<8x32xf32>
    %33 = arith.addf %31, %32 : vector<8x32xf32>
    %cst_22 = arith.constant 5.000000e-01 : f32
    %34 = vector.broadcast %cst_22 : f32 to vector<8x32xf32>
    %35 = arith.mulf %34, %33 : vector<8x32xf32>
    %36 = math.tanh %35 : vector<8x32xf32>
    %cst_23 = arith.constant 1.000000e+00 : f32
    %37 = vector.broadcast %cst_23 : f32 to vector<8x32xf32>
    %38 = arith.addf %36, %37 : vector<8x32xf32>
    %cst_24 = arith.constant 5.000000e-01 : f32
    %39 = vector.broadcast %cst_24 : f32 to vector<8x32xf32>
    %40 = arith.mulf %39, %38 : vector<8x32xf32>
    %41 = vector.extract_strided_slice %16 {offsets = [0, 64], sizes = [8, 32], strides = [1, 1]} : vector<8x96xf32> to vector<8x32xf32>
    %42 = vector.extract_strided_slice %20 {offsets = [0, 64], sizes = [8, 32], strides = [1, 1]} : vector<8x96xf32> to vector<8x32xf32>
    %43 = arith.mulf %30, %42 : vector<8x32xf32>
    %44 = arith.addf %41, %43 : vector<8x32xf32>
    %45 = math.tanh %44 : vector<8x32xf32>
    %cst_25 = arith.constant 1.000000e+00 : f32
    %46 = vector.broadcast %cst_25 : f32 to vector<8x32xf32>
    %47 = arith.subf %46, %40 : vector<8x32xf32>
    %48 = arith.mulf %47, %45 : vector<8x32xf32>
    %49 = arith.mulf %40, %3 : vector<8x32xf32>
    %50 = arith.addf %48, %49 : vector<8x32xf32>
    %c0_26 = arith.constant 0 : index
    %c0_27 = arith.constant 0 : index
    %51 = vector.load %arg8[%c0_26, %c0_27] : memref<32x32xf32, #tpu.memory_space<vmem>>, vector<32x32xf32>
    %cst_28 = arith.constant dense<0.000000e+00> : vector<8x32xf32>
    %52 = tpu.matmul %50, %51, %cst_28 {dimension_numbers = #tpu.dot_dimension_numbers<[1], [0], [0], [1], [0, 0, 1, 1], [], []>} : vector<8x32xf32>, vector<32x32xf32>, vector<8x32xf32> -> vector<8x32xf32>
    %53 = vector.broadcast %9 : vector<1x32xf32> to vector<8x32xf32>
    %54 = arith.addf %52, %53 : vector<8x32xf32>
    %cst_29 = arith.constant 0.000000e+00 : f32
    %55 = vector.broadcast %cst_29 : f32 to vector<8x32xf32>
    %56 = arith.maximumf %54, %55 : vector<8x32xf32>
    %57 = math.absf %54 : vector<8x32xf32>
    %cst_30 = arith.constant 0.000000e+00 : f32
    %58 = vector.broadcast %cst_30 : f32 to vector<8x32xf32>
    %59 = arith.subf %58, %57 : vector<8x32xf32>
    %60 = math.exp %59 : vector<8x32xf32>
    %cst_31 = arith.constant 1.000000e+00 : f32
    %61 = vector.broadcast %cst_31 : f32 to vector<8x32xf32>
    %62 = arith.addf %61, %60 : vector<8x32xf32>
    %63 = math.log %62 : vector<8x32xf32>
    %64 = arith.addf %56, %63 : vector<8x32xf32>
    %65 = tpu.iota {dimensions = array<i32: 1>} : vector<8x32xi32>
    %c16_i32 = arith.constant 16 : i32
    %66 = vector.broadcast %c16_i32 : i32 to vector<8x32xi32>
    %67 = arith.cmpi sge, %65, %66 : vector<8x32xi32>
    %cst_32 = arith.constant 9.99999974E-5 : f32
    %68 = vector.broadcast %cst_32 : f32 to vector<8x32xf32>
    %69 = arith.addf %64, %68 : vector<8x32xf32>
    %70 = arith.select %67, %69, %54 : vector<8x32xi1>, vector<8x32xf32>
    %c0_33 = arith.constant 0 : index
    %c0_34 = arith.constant 0 : index
    %c0_35 = arith.constant 0 : index
    %71 = vector.load %arg10[%c0_33, %c0_34, %c0_35] : memref<1x8x32xf32, #tpu.memory_space<vmem>>, vector<1x8x32xf32>
    %72 = vector.shape_cast %71 : vector<1x8x32xf32> to vector<8x32xf32>
    %73 = vector.shape_cast %50 : vector<8x32xf32> to vector<1x8x32xf32>
    tpu.vector_store %arg10[%c0_33, %c0_34, %c0_35], %73 {strides = array<i32>} : memref<1x8x32xf32, #tpu.memory_space<vmem>>, vector<1x8x32xf32>,
    %c0_36 = arith.constant 0 : index
    %c0_37 = arith.constant 0 : index
    %c0_38 = arith.constant 0 : index
    %74 = vector.load %arg11[%c0_36, %c0_37, %c0_38] : memref<1x8x32xf32, #tpu.memory_space<vmem>>, vector<1x8x32xf32>
    %75 = vector.shape_cast %74 : vector<1x8x32xf32> to vector<8x32xf32>
    %76 = vector.shape_cast %70 : vector<8x32xf32> to vector<1x8x32xf32>
    tpu.vector_store %arg11[%c0_36, %c0_37, %c0_38], %76 {strides = array<i32>} : memref<1x8x32xf32, #tpu.memory_space<vmem>>, vector<1x8x32xf32>,
    %c0_39 = arith.constant 0 : index
    %c0_40 = arith.constant 0 : index
    %77 = vector.load %arg12[%c0_39, %c0_40] : memref<8x32xf32, #tpu.memory_space<vmem>>, vector<8x32xf32>
    tpu.vector_store %arg12[%c0_39, %c0_40], %50 {strides = array<i32>} : memref<8x32xf32, #tpu.memory_space<vmem>>, vector<8x32xf32>,
    %78 = vector.extract_strided_slice %70 {offsets = [0, 0], sizes = [8, 16], strides = [1, 1]} : vector<8x32xf32> to vector<8x16xf32>
    %79 = vector.extract_strided_slice %70 {offsets = [0, 16], sizes = [8, 16], strides = [1, 1]} : vector<8x32xf32> to vector<8x16xf32>
    %c0_41 = arith.constant 0 : index
    %c0_42 = arith.constant 0 : index
    %c0_43 = arith.constant 0 : index
    %80 = vector.load %arg4[%c0_41, %c0_42, %c0_43] : memref<1x8x16xf32, #tpu.memory_space<vmem>>, vector<1x8x16xf32>
    %81 = vector.shape_cast %80 : vector<1x8x16xf32> to vector<8x16xf32>
    %82 = arith.mulf %79, %81 : vector<8x16xf32>
    %83 = arith.addf %78, %82 : vector<8x16xf32>
    %c0_44 = arith.constant 0 : index
    %c0_45 = arith.constant 0 : index
    %84 = vector.load %arg13[%c0_44, %c0_45] : memref<8x16xf32, #tpu.memory_space<vmem>>, vector<8x16xf32>
    tpu.vector_store %arg13[%c0_44, %c0_45], %83 {strides = array<i32>} : memref<8x16xf32, #tpu.memory_space<vmem>>, vector<8x16xf32>,
    return
  }
  func.func @transform_0(%arg0: i32) -> (i32, i32, i32) {
    %c0_i32 = arith.constant 0 : i32
    %c0_i32_0 = arith.constant 0 : i32
    %c0_i32_1 = arith.constant 0 : i32
    return %arg0, %c0_i32, %c0_i32_0 : i32, i32, i32
  }
  func.func @transform_1(%arg0: i32) -> (i32, i32) {
    %c0_i32 = arith.constant 0 : i32
    %c0_i32_0 = arith.constant 0 : i32
    %c0_i32_1 = arith.constant 0 : i32
    return %c0_i32, %c0_i32_0 : i32, i32
  }
  func.func @transform_2(%arg0: i32) -> (i32, i32) {
    %c0_i32 = arith.constant 0 : i32
    %c0_i32_0 = arith.constant 0 : i32
    %c0_i32_1 = arith.constant 0 : i32
    return %c0_i32, %c0_i32_0 : i32, i32
  }
  func.func @transform_3(%arg0: i32) -> (i32, i32, i32) {
    %c0_i32 = arith.constant 0 : i32
    %c0_i32_0 = arith.constant 0 : i32
    %c0_i32_1 = arith.constant 0 : i32
    return %arg0, %c0_i32, %c0_i32_0 : i32, i32, i32
  }
  func.func @transform_4(%arg0: i32) -> (i32, i32) {
    %c0_i32 = arith.constant 0 : i32
    %c0_i32_0 = arith.constant 0 : i32
    %c0_i32_1 = arith.constant 0 : i32
    return %c0_i32, %c0_i32_0 : i32, i32
  }
  func.func @transform_5(%arg0: i32) -> (i32, i32) {
    %c0_i32 = arith.constant 0 : i32
    %c0_i32_0 = arith.constant 0 : i32
    %c0_i32_1 = arith.constant 0 : i32
    return %c0_i32, %c0_i32_0 : i32, i32
  }
  func.func @transform_6(%arg0: i32) -> (i32, i32) {
    %c0_i32 = arith.constant 0 : i32
    %c0_i32_0 = arith.constant 0 : i32
    %c0_i32_1 = arith.constant 0 : i32
    return %c0_i32, %c0_i32_0 : i32, i32
  }
  func.func @transform_7(%arg0: i32) -> (i32, i32) {
    %c0_i32 = arith.constant 0 : i32
    %c0_i32_0 = arith.constant 0 : i32
    %c0_i32_1 = arith.constant 0 : i32
    return %c0_i32, %c0_i32_0 : i32, i32
  }
  func.func @transform_8(%arg0: i32) -> (i32, i32) {
    %c0_i32 = arith.constant 0 : i32
    %c0_i32_0 = arith.constant 0 : i32
    %c0_i32_1 = arith.constant 0 : i32
    return %c0_i32, %c0_i32_0 : i32, i32
  }
  func.func @transform_9(%arg0: i32) -> (i32, i32, i32) {
    %c0_i32 = arith.constant 0 : i32
    %c0_i32_0 = arith.constant 0 : i32
    %c0_i32_1 = arith.constant 0 : i32
    return %arg0, %c0_i32, %c0_i32_0 : i32, i32, i32
  }
  func.func @transform_10(%arg0: i32) -> (i32, i32, i32) {
    %c0_i32 = arith.constant 0 : i32
    %c0_i32_0 = arith.constant 0 : i32
    %c0_i32_1 = arith.constant 0 : i32
    return %arg0, %c0_i32, %c0_i32_0 : i32, i32, i32
  }
}

</mosaic_0001>

<llo_original>
// kernel: rssm_forward.1
$region0: #{rssm_forward.1}
  #allocation0 [shape = 'u32[]', space=smem, size = 0x4, offset = 0x4, fixed_abs, tag = 'smem constant byte address 0x4 - core index']
  #allocation1 [shape = 'u32[72,128]{1,0:T(1,128)}', space=vmem, size = 0x9000, scoped, tag = 'internal scratch']
  #allocation2 [shape = 'f32[8,32]{1,0:T(8,128)}', space=vmem, size = 0x1000, scoped, tag = 'scratch operand']
  #allocation3 [shape = 'f32[8,16]{1,0:T(8,128)}', space=vmem, size = 0x1000, scoped, tag = 'scratch operand']
  %s0 = inlined_call_operand.vmem [shape: f32[1,8,8], index: 0, kind: input, shape index: {}]
  %s1 = inlined_call_operand.vmem [shape: f32[8,16], index: 1, kind: input, shape index: {}]
  %s2 = inlined_call_operand.vmem [shape: f32[8,32], index: 2, kind: input, shape index: {}]
  %s3 = inlined_call_operand.vmem [shape: f32[1,8,16], index: 3, kind: input, shape index: {}]
  %s4 = inlined_call_operand.vmem [shape: f32[16,96], index: 4, kind: input, shape index: {}]
  %s5 = inlined_call_operand.vmem [shape: f32[8,96], index: 5, kind: input, shape index: {}]
  %s6 = inlined_call_operand.hbm [shape: f32[32,96], index: 6, kind: input, shape index: {}]
  %s7 = inlined_call_operand.hbm [shape: f32[32,32], index: 7, kind: input, shape index: {}]
  %s8 = inlined_call_operand.vmem [shape: f32[3,96], index: 8, kind: input, shape index: {}]
  %s9 = inlined_call_operand.vmem [shape: f32[1,8,32], index: 9, kind: output, shape index: {0}]
  %s10 = inlined_call_operand.vmem [shape: f32[1,8,32], index: 10, kind: output, shape index: {1}]
  %11 = xla_tuple %s9, %s10
  %s12 = sld [smem:[#allocation0]]
  $region66: #{rssm_forward.1} parent=0
    _
  %s14 = ssub.s32 1, %s12
  %s15 = scalar_select 0, %s14, %s12
  $region1: #{rssm_forward.1} parent=0
    #allocation4 [shape = 'u8[16384]{0}', space=vmem, size = 0x4000, scoped, tag = 'input window, operand 6, single buffered']
    #allocation5 [shape = 's32[1]{0}', space=sflag, size = 0x4, scoped, tag = 'scoped memory for rssm_forward.1']
    #allocation6 [shape = 'u8[16384]{0}', space=vmem, size = 0x4000, scoped, tag = 'input window, operand 7, single buffered']
    #allocation7 [shape = 's32[1]{0}', space=sflag, size = 0x4, scoped, tag = 'scoped memory for rssm_forward.1']
    %16 = vsyncpa [#allocation5], 0
    %17 = vsyncpa [#allocation7], 0
    // Predicated region
    $region2: #{rssm_forward.1} parent=1 // pred_check
      _
    $region3: #{rssm_forward.1} parent=1 // pred_check_branch
      %19 = sbr.rel (0) target = $region5
    $region4: #{rssm_forward.1} parent=1 // pred_region
      _
    $region5: #{rssm_forward.1} parent=1 // pred_fallthru
      _
    // Predicated region
    $region6: #{rssm_forward.1} parent=1 // pred_check
      _
    $region7: #{rssm_forward.1} parent=1 // pred_check_branch
      %21 = sbr.rel (0) target = $region9
    $region8: #{rssm_forward.1} parent=1 // pred_region
      _
    $region9: #{rssm_forward.1} parent=1 // pred_fallthru
      _
    // Predicated region
    $region10: #{rssm_forward.1} parent=1 // pred_check
      _
    $region11: #{rssm_forward.1} parent=1 // pred_check_branch
      %23 = sbr.rel (0) target = $region13
    $region12: #{rssm_forward.1} parent=1 // pred_region
      _
    $region13: #{rssm_forward.1} parent=1 // pred_fallthru
      _
    // Predicated region
    $region14: #{rssm_forward.1} parent=1 // pred_check
      _
    $region15: #{rssm_forward.1} parent=1 // pred_check_branch
      %25 = sbr.rel (0) target = $region17
    $region16: #{rssm_forward.1} parent=1 // pred_region
      _
    $region17: #{rssm_forward.1} parent=1 // pred_fallthru
      _
    // Predicated region
    $region18: #{rssm_forward.1} parent=1 // pred_check
      _
    $region19: #{rssm_forward.1} parent=1 // pred_check_branch
      %27 = sbr.rel (0) target = $region21
    $region20: #{rssm_forward.1} parent=1 // pred_region
      _
    $region21: #{rssm_forward.1} parent=1 // pred_fallthru
      _
    // Predicated region
    $region22: #{rssm_forward.1} parent=1 // pred_check
      _
    $region23: #{rssm_forward.1} parent=1 // pred_check_branch
      %29 = sbr.rel (0) target = $region25
    $region24: #{rssm_forward.1} parent=1 // pred_region
      _
    $region25: #{rssm_forward.1} parent=1 // pred_fallthru
      _
    // Predicated region
    $region26: #{rssm_forward.1} parent=1 // pred_check
      _
    $region27: #{rssm_forward.1} parent=1 // pred_check_branch
      %31 = sbr.rel (0) target = $region29
    $region28: #{rssm_forward.1} parent=1 // pred_region
      %33 = vsyncadd [#allocation5], 0
      %s34 = sshll.u32 %s6, 4
      %s35 = int_to_ptr.hbm [resolvable:$true] %s34
      %s36 = sshll.u32 [#allocation4], 4
      %s37 = int_to_ptr.vmem [resolvable:$true] %s36
      %42 = dma.hbm_to_vmem [thread:$0]  %s35, 512, %s37, [#allocation5], 128, 128, 8
    $region29: #{rssm_forward.1} parent=1 // pred_fallthru
      _
    // Predicated region
    $region30: #{rssm_forward.1} parent=1 // pred_check
      _
    $region31: #{rssm_forward.1} parent=1 // pred_check_branch
      %44 = sbr.rel (0) target = $region33
    $region32: #{rssm_forward.1} parent=1 // pred_region
      %46 = vsyncadd [#allocation7], 0
      %s47 = sshll.u32 %s7, 4
      %s48 = int_to_ptr.hbm [resolvable:$true] %s47
      %s49 = sshll.u32 [#allocation6], 4
      %s50 = int_to_ptr.vmem [resolvable:$true] %s49
      %55 = dma.hbm_to_vmem [thread:$0]  %s48, 512, %s50, [#allocation7], 128, 128, 8
    $region33: #{rssm_forward.1} parent=1 // pred_fallthru
      _
    // Predicated region
    $region34: #{rssm_forward.1} parent=1 // pred_check
      _
    $region35: #{rssm_forward.1} parent=1 // pred_check_branch
      %57 = sbr.rel (0) target = $region37
    $region36: #{rssm_forward.1} parent=1 // pred_region
      _
    $region37: #{rssm_forward.1} parent=1 // pred_fallthru
      _
    // Predicated region
    $region38: #{rssm_forward.1} parent=1 // pred_check
      _
    $region39: #{rssm_forward.1} parent=1 // pred_check_branch
      %59 = sbr.rel (0) target = $region41
    $region40: #{rssm_forward.1} parent=1 // pred_region
      %61 = dma.done [#allocation5], 512
    $region41: #{rssm_forward.1} parent=1 // pred_fallthru
      _
    // Predicated region
    $region42: #{rssm_forward.1} parent=1 // pred_check
      _
    $region43: #{rssm_forward.1} parent=1 // pred_check_branch
      %63 = sbr.rel (0) target = $region45
    $region44: #{rssm_forward.1} parent=1 // pred_region
      %65 = dma.done [#allocation7], 512
    $region45: #{rssm_forward.1} parent=1 // pred_fallthru
      _
    %p66 = scmp.eq.s32.totalorder 0, 0
    // Predicated region
    $region46: #{rssm_forward.1} parent=1 // pred_check
      %p67 = pneg %p66
    $region47: #{rssm_forward.1} parent=1 // pred_check_branch
      %69 = sbr.rel (%p67) target = $region49
    $region48: #{rssm_forward.1} parent=1 // pred_region
      %v70 = vld [vmem:[%s2] sm:$0xff]
      %vm71 = vcmask 261120
      %72 = vst.msk [vmem:[#allocation2] sm:$0xff] %vm71, %v70
      %v73 = vld [vmem:[%s1] sm:$0xff]
      %vm74 = vcmask 130048
      %75 = vst.msk [vmem:[#allocation3] sm:$0xff] %vm74, %v73
    $region49: #{rssm_forward.1} parent=1 // pred_fallthru
      _
    %v76 = vld [vmem:[#allocation2] sm:$0xff]
    %v77 = vld [vmem:[#allocation3] sm:$0xff]
    %v78 = vld [vmem:[%s0] sm:$0xff]
    %v79 = vld [vmem:[%s8] sm:$0x1]
    %v80 = vld [vmem:[%s8 + $0x1] sm:$0x1]
    %v81 = vld [vmem:[%s8 + $0x2] sm:$0x1]
    %v82 = vld [vmem:[%s4] sm:$0xff]
    %v83 = vld [vmem:[%s4 + $0x8] sm:$0xff]
    %v84 = vld [vmem:[%s5] sm:$0xff]
    %vm85 = vcmask 64512
    %v87 = vsel %vm85, %v78, 0
    %89 = vmatpush.msra.mxu0 0.0
    %90 = vmatpush.msra.mxu0 0.0
    %91 = vmatpush.msra.mxu0 0.0
    %92 = vmatpush.msra.mxu0 0.0
    %93 = vmatpush.msra.mxu0 0.0
    %94 = vmatpush.msra.mxu0 0.0
    %95 = vmatpush.msra.mxu0 0.0
    %96 = vmatpush.msra.mxu0 0.0
    %97 = vmatpush.msra.mxu0 0.0
    %98 = vmatpush.msra.mxu0 0.0
    %99 = vmatpush.msra.mxu0 0.0
    %100 = vmatpush.msra.mxu0 0.0
    %101 = vmatpush.msra.mxu0 0.0
    %102 = vmatpush.msra.mxu0 0.0
    %103 = vmatpush.msra.mxu0 0.0
    %104 = vmatpush.msra.mxu0 %v84
    %105 = vmatmul.f32.gmra.mxu0 %v87
    %v106 = vpop.f32.mrf.mxu0
    %v107 = vadd.f32 0.0, %v106
    %108 = vdwg.mxu0
    %vm109 = vcmask 130048
    %v111 = vsel %vm109, %v77, 0
    %113 = vmatpush.msra.mxu0 0.0
    %114 = vmatpush.msra.mxu0 0.0
    %115 = vmatpush.msra.mxu0 0.0
    %116 = vmatpush.msra.mxu0 0.0
    %117 = vmatpush.msra.mxu0 0.0
    %118 = vmatpush.msra.mxu0 0.0
    %119 = vmatpush.msra.mxu0 0.0
    %120 = vmatpush.msra.mxu0 0.0
    %121 = vmatpush.msra.mxu0 0.0
    %122 = vmatpush.msra.mxu0 0.0
    %123 = vmatpush.msra.mxu0 0.0
    %124 = vmatpush.msra.mxu0 0.0
    %125 = vmatpush.msra.mxu0 0.0
    %126 = vmatpush.msra.mxu0 0.0
    %127 = vmatpush.msra.mxu0 %v83
    %128 = vmatpush.msra.mxu0 %v82
    %129 = vmatmul.f32.gmra.mxu0 %v111
    %v130 = vpop.f32.mrf.mxu0
    %v131 = vadd.f32 %v107, %v130
    %132 = vdwg.mxu0
    %v133 = vperm.slane %v79, 0
    %v134 = vadd.f32 %v131, %v133
    %v135 = vld [vmem:[#allocation4] sm:$0xff]
    %v136 = vld [vmem:[#allocation4 + $0x8] sm:$0xff]
    %v137 = vld [vmem:[#allocation4 + $0x10] sm:$0xff]
    %v138 = vld [vmem:[#allocation4 + $0x18] sm:$0xff]
    %v139 = vperm.slane %v80, 0
    %vm140 = vcmask 261120
    %v142 = vsel %vm140, %v76, 0
    %144 = vmatpush.msra.mxu0 0.0
    %145 = vmatpush.msra.mxu0 0.0
    %146 = vmatpush.msra.mxu0 0.0
    %147 = vmatpush.msra.mxu0 0.0
    %148 = vmatpush.msra.mxu0 0.0
    %149 = vmatpush.msra.mxu0 0.0
    %150 = vmatpush.msra.mxu0 0.0
    %151 = vmatpush.msra.mxu0 0.0
    %152 = vmatpush.msra.mxu0 0.0
    %153 = vmatpush.msra.mxu0 0.0
    %154 = vmatpush.msra.mxu0 0.0
    %155 = vmatpush.msra.mxu0 0.0
    %156 = vmatpush.msra.mxu0 %v138
    %157 = vmatpush.msra.mxu0 %v137
    %158 = vmatpush.msra.mxu0 %v136
    %159 = vmatpush.msra.mxu0 %v135
    %160 = vmatmul.f32.gmra.mxu0 %v142
    %v161 = vpop.f32.mrf.mxu0
    %v162 = vadd.f32 %v139, %v161
    %163 = vdwg.mxu0
    %v164 = vadd.f32 %v134, %v162
    %v165 = vmul.f32 %v164, 0.5
    %v166 = vtanh.pop %v165
    %v167 = vadd.f32 %v166, 1.0
    %v168 = vmul.f32 %v167, 0.5
    %170 = vrot.lane.b32.xlu0 %v162, 64
    %v171 = vpop.permute.xlu0 %170
    %v173 = vmul.f32 %v168, %v171
    %175 = vrot.lane.b32.xlu0 %v173, 64
    %v176 = vpop.permute.xlu0 %175
    %v178 = vadd.f32 %v134, %v176
    %v179 = vtanh.pop %v178
    %v180 = vsub.f32 1.0, %v168
    %182 = vrot.lane.b32.xlu0 %v179, 96
    %v183 = vpop.permute.xlu0 %182
    %v185 = vmul.f32 %v180, %v183
    %186 = vrot.lane.b32.xlu0 %v76, 32
    %v187 = vpop.permute.xlu0 %186
    %v189 = vmul.f32 %v168, %v187
    %v190 = vadd.f32 %v185, %v189
    %v191 = vld [vmem:[#allocation6] sm:$0xff]
    %v192 = vld [vmem:[#allocation6 + $0x8] sm:$0xff]
    %v193 = vld [vmem:[#allocation6 + $0x10] sm:$0xff]
    %v194 = vld [vmem:[#allocation6 + $0x18] sm:$0xff]
    %v195 = vperm.slane %v81, 0
    %197 = vrot.lane.b32.xlu0 %v190, 96
    %v198 = vpop.permute.xlu0 %197
    %v199 = vsel %vm140, %v198, 0
    %201 = vmatpush.msra.mxu0 0.0
    %202 = vmatpush.msra.mxu0 0.0
    %203 = vmatpush.msra.mxu0 0.0
    %204 = vmatpush.msra.mxu0 0.0
    %205 = vmatpush.msra.mxu0 0.0
    %206 = vmatpush.msra.mxu0 0.0
    %207 = vmatpush.msra.mxu0 0.0
    %208 = vmatpush.msra.mxu0 0.0
    %209 = vmatpush.msra.mxu0 0.0
    %210 = vmatpush.msra.mxu0 0.0
    %211 = vmatpush.msra.mxu0 0.0
    %212 = vmatpush.msra.mxu0 0.0
    %213 = vmatpush.msra.mxu0 %v194
    %214 = vmatpush.msra.mxu0 %v193
    %215 = vmatpush.msra.mxu0 %v192
    %216 = vmatpush.msra.mxu0 %v191
    %217 = vmatmul.f32.gmra.mxu0 %v199
    %v218 = vpop.f32.mrf.mxu0
    %v219 = vadd.f32 %v195, %v218
    %220 = vdwg.mxu0
    %v221 = vmax.f32 %v219, 0.0
    %v222 = vand.u32 2147483647, %v219
    %v223 = vsub.f32 0.0, %v222
    %v224 = vmul.f32 %v223, 1.442695
    %v225 = vpow.pop %v224
    %v226 = vadd.f32 %v225, 1.0
    %v227 = vlog2.pop %v226
    %v228 = vmul.f32 %v227, 0.6931472
    %v229 = vadd.f32 %v221, %v228
    %v230 = vlaneseq
    %v231 = vand.u32 %v230, 127
    %vm232 = vcmp.ge.s32.totalorder %v231, 16
    %v233 = vadd.f32 %v229, 0.0001
    %v234 = vsel %vm232, %v233, %v219
    %236 = vst.msk [vmem:[%s9] sm:$0xff] %vm140, %v198
    %237 = vst.msk [vmem:[%s10] sm:$0xff] %vm140, %v234
    %238 = vst.msk [vmem:[#allocation2] sm:$0xff] %vm140, %v198
    %v239 = vld [vmem:[%s3] sm:$0xff]
    %241 = vrot.lane.b32.xlu0 %v239, 16
    %v242 = vpop.permute.xlu0 %241
    %v244 = vmul.f32 %v234, %v242
    %246 = vrot.lane.b32.xlu0 %v244, 112
    %v247 = vpop.permute.xlu0 %246
    %v249 = vadd.f32 %v234, %v247
    %250 = vst.msk [vmem:[#allocation3] sm:$0xff] %vm109, %v249
    // Predicated region
    $region50: #{rssm_forward.1} parent=1 // pred_check
      _
    $region51: #{rssm_forward.1} parent=1 // pred_check_branch
      %252 = sbr.rel (0) target = $region53
    $region52: #{rssm_forward.1} parent=1 // pred_region
      _
    $region53: #{rssm_forward.1} parent=1 // pred_fallthru
      _
    // Predicated region
    $region54: #{rssm_forward.1} parent=1 // pred_check
      _
    $region55: #{rssm_forward.1} parent=1 // pred_check_branch
      %254 = sbr.rel (0) target = $region57
    $region56: #{rssm_forward.1} parent=1 // pred_region
      _
    $region57: #{rssm_forward.1} parent=1 // pred_fallthru
      _
    // Predicated region
    $region58: #{rssm_forward.1} parent=1 // pred_check
      _
    $region59: #{rssm_forward.1} parent=1 // pred_check_branch
      %256 = sbr.rel (0) target = $region61
    $region60: #{rssm_forward.1} parent=1 // pred_region
      _
    $region61: #{rssm_forward.1} parent=1 // pred_fallthru
      _
    // Predicated region
    $region62: #{rssm_forward.1} parent=1 // pred_check
      _
    $region63: #{rssm_forward.1} parent=1 // pred_check_branch
      %258 = sbr.rel (0) target = $region65
    $region64: #{rssm_forward.1} parent=1 // pred_region
      _
    $region65: #{rssm_forward.1} parent=1 // pred_fallthru
      _
    %259 = vsyncpa [#allocation5], 1
    %260 = vsyncpa [#allocation7], 1

</llo_original>
